<compile_context>
chip_gen: v7x
topology: tpu7x:2x2x1
jax: 0.10.0
libtpu: 0.0.40
codegen_flags: <defaults>
</compile_context>

<pallas_src>
import jax
import jax.numpy as jnp
from jax.experimental import pallas as pl
from jax.experimental.pallas import tpu as pltpu


def _identity_kernel(x_ref, o_ref):
    # Elementwise identity: copy the whole VMEM tile.
    o_ref[...] = x_ref[...]


def null_forward(x):
    """Pallas implementation of Null.forward: returns x unchanged."""
    orig_shape = x.shape
    n = x.size
    if n == 0:
        return x

    itemsize = jnp.dtype(x.dtype).itemsize
    # Sub-32-bit dtypes pack along sublanes: 8 rows for 32-bit, 16 for bf16,
    # 32 for int8 -> keep block rows a multiple of the packed tile.
    pack = 8 * max(1, 4 // itemsize)

    cost = pl.CostEstimate(flops=0, transcendentals=0,
                           bytes_accessed=2 * n * itemsize)

    # Pick a lane-dense width (large multiple of 128) that divides the total
    # element count so no padding / slicing is needed in the wrapper.
    width = None
    for w in (4096, 2048, 1024, 512, 256, 128):
        if n % w == 0:
            width = w
            break

    if width is None:
        # Rare fallback: element count not a multiple of 128. Copy the whole
        # flattened array as one full-extent block (fine for small arrays).
        # TODO(synk): tile the non-128-divisible case for VMEM-exceeding sizes.
        x2d = x.reshape(1, n)
        out2d = pl.pallas_call(
            _identity_kernel,
            out_shape=jax.ShapeDtypeStruct((1, n), x.dtype),
            input_output_aliases={0: 0},
            cost_estimate=cost,
        )(x2d)
        return out2d.reshape(orig_shape)

    rows = n // width

    # ~2 MiB per block: with double-buffered input + output that is ~8 MiB of
    # scoped VMEM -- safe on v5e (16 MiB default), v6e and v7x.
    target_block_bytes = 2 * 1024 * 1024
    rows_per_block = (target_block_bytes // (width * itemsize)) // pack * pack
    rows_per_block = max(pack, rows_per_block)
    block_rows = min(rows, rows_per_block)

    grid = (pl.cdiv(rows, block_rows),)

    x2d = x.reshape(rows, width)  # contiguous reshape: bitcast, no data copy
    out2d = pl.pallas_call(
        _identity_kernel,
        out_shape=jax.ShapeDtypeStruct((rows, width), x.dtype),
        grid=grid,
        in_specs=[pl.BlockSpec((block_rows, width), lambda i: (i, 0))],
        out_specs=pl.BlockSpec((block_rows, width), lambda i: (i, 0)),
        input_output_aliases={0: 0},
        compiler_params=pltpu.CompilerParams(
            dimension_semantics=("parallel",),
        ),
        cost_estimate=cost,
    )(x2d)
    return out2d.reshape(orig_shape)


if __name__ == "__main__":
    key = jax.random.PRNGKey(0)
    x = jax.random.normal(key, (2, 4, 16, 16), dtype=jnp.float32)

    null_fn = jax.jit(null_forward)
    y = null_fn(x)
    jax.block_until_ready(y)

    assert y.shape == x.shape, (y.shape, x.shape)
    assert y.dtype == x.dtype, (y.dtype, x.dtype)
    assert bool(jnp.all(y == x)), "identity mismatch"

    print("KERNEL_OK")
</pallas_src>

<mosaic_0001>
module attributes {stable_mosaic.version = 11 : i64} {
  func.func @_identity_kernel(%arg0: i32, %arg1: memref<1x2048xf32, #tpu.memory_space<vmem>>, %arg2: memref<1x2048xf32, #tpu.memory_space<vmem>>) attributes {dimension_semantics = [#tpu.dimension_semantics<parallel>], iteration_bounds = array<i64: 1>, scalar_prefetch = 0 : i64, scratch_operands = 0 : i64, tpu.core_type = #tpu.core_type<tc>, window_params = [{transform_indices = @transform_0, window_bounds = array<i64: 1, 2048>}, {transform_indices = @transform_1, window_bounds = array<i64: 1, 2048>}]} {
    %c0 = arith.constant 0 : index
    %c0_0 = arith.constant 0 : index
    %0 = vector.load %arg1[%c0, %c0_0] : memref<1x2048xf32, #tpu.memory_space<vmem>>, vector<1x2048xf32>
    %c0_1 = arith.constant 0 : index
    %c0_2 = arith.constant 0 : index
    %1 = vector.load %arg2[%c0_1, %c0_2] : memref<1x2048xf32, #tpu.memory_space<vmem>>, vector<1x2048xf32>
    tpu.vector_store %arg2[%c0_1, %c0_2], %0 {strides = array<i32>} : memref<1x2048xf32, #tpu.memory_space<vmem>>, vector<1x2048xf32>,
    return
  }
  func.func @transform_0(%arg0: i32) -> (i32, i32) {
    %c0_i32 = arith.constant 0 : i32
    %c0_i32_0 = arith.constant 0 : i32
    return %arg0, %c0_i32 : i32, i32
  }
  func.func @transform_1(%arg0: i32) -> (i32, i32) {
    %c0_i32 = arith.constant 0 : i32
    %c0_i32_0 = arith.constant 0 : i32
    return %arg0, %c0_i32 : i32, i32
  }
}

</mosaic_0001>

<llo_original>
// kernel: null_forward.1
$region0: #{null_forward.1}
  #allocation0 [shape = 'u32[]', space=smem, size = 0x4, offset = 0x4, fixed_abs, tag = 'smem constant byte address 0x4 - core index']
  #allocation1 [shape = 'u32[144,128]{1,0:T(1,128)}', space=vmem, size = 0x12000, scoped, tag = 'internal scratch']
  %s0 = inlined_call_operand.vmem [shape: f32[1,2048], index: 0, kind: input, shape index: {}, may-alias: {0,1}]
  %s1 = inlined_call_operand.vmem [shape: f32[1,2048], index: 1, kind: output, shape index: {}, may-alias: {0,1}]
  %s2 = sld [smem:[#allocation0]]
  $region14: #{null_forward.1} parent=0
    _
  %s4 = ssub.s32 1, %s2
  %s5 = scalar_select 0, %s4, %s2
  // Predicated region
  $region2: #{null_forward.1} parent=0 // pred_check
    _
  $region3: #{null_forward.1} parent=0 // pred_check_branch
    %7 = sbr.rel (0) target = $region5
  $region4: #{null_forward.1} parent=0 // pred_region
    _
  $region5: #{null_forward.1} parent=0 // pred_fallthru
    _
  %v8 = vld [vmem:[%s0] sm:$0xff]
  %v9 = vld [vmem:[%s0 + $0x8] sm:$0xff]
  %10 = vst [vmem:[%s1] sm:$0xff] %v8
  %11 = vst [vmem:[%s1 + $0x8] sm:$0xff] %v9
  // Predicated region
  $region6: #{null_forward.1} parent=0 // pred_check
    _
  $region7: #{null_forward.1} parent=0 // pred_check_branch
    %13 = sbr.rel (0) target = $region9
  $region8: #{null_forward.1} parent=0 // pred_region
    _
  $region9: #{null_forward.1} parent=0 // pred_fallthru
    _
  // Predicated region
  $region10: #{null_forward.1} parent=0 // pred_check
    _
  $region11: #{null_forward.1} parent=0 // pred_check_branch
    %15 = sbr.rel (0) target = $region13
  $region12: #{null_forward.1} parent=0 // pred_region
    _
  $region13: #{null_forward.1} parent=0 // pred_fallthru
    _

</llo_original>
